<compile_context>
chip_gen: v7x
topology: tpu7x:2x2x1
jax: 0.10.0
libtpu: 0.0.40
codegen_flags: <defaults>
</compile_context>

<pallas_src>
import functools

import jax
import jax.numpy as jnp
from jax import lax
from jax.experimental import pallas as pl
from jax.experimental.pallas import tpu as pltpu

_LANE = 128
_SUBLANE = 8


def _ce_rows_kernel(tgt_ref, pred_ref, out_ref, *, ck, n_chunks):
    """Per grid step: per-row cross-entropy NLL for an (hb, bb, C) logits block.

    tgt_ref : (hb, bb, 1) int32 class indices
    pred_ref: (hb, bb, C) logits in native dtype (e.g. bf16)
    out_ref : (hb, bb, 1) float32 per-row NLL (mean / weighting done in wrapper)

    The class axis is swept once in `ck`-wide chunks with online max, rescaled
    exp-sum and picked-logit accumulators, so f32 temporaries stay chunk-sized.
    """
    tgt = tgt_ref[...]                                          # (hb, bb, 1) int32

    def chunk_stats(chunk, base):
        # chunk: (hb, bb, ck) f32; base: starting class index of this chunk.
        cmax = jnp.max(chunk, axis=-1, keepdims=True)            # (hb, bb, 1)
        sexp = jnp.sum(jnp.exp(chunk - cmax), axis=-1, keepdims=True)
        # Hoisted / shrunk iota: (1, 1, ck), broadcast against the labels.
        col = lax.broadcasted_iota(jnp.int32, (1, 1, ck), 2) + base
        pick = jnp.sum(jnp.where(col == tgt, chunk, 0.0), axis=-1, keepdims=True)
        return cmax, sexp, pick

    # Chunk 0 peeled: initializes the online stats without an exp(-inf) rescale.
    m, s, picked = chunk_stats(pred_ref[:, :, pl.ds(0, ck)].astype(jnp.float32), 0)

    def body(k, carry):
        m, s, picked = carry
        base = pl.multiple_of(k * ck, ck)
        chunk = pred_ref[:, :, pl.ds(base, ck)].astype(jnp.float32)
        cmax, sexp, pick = chunk_stats(chunk, base)
        m_new = jnp.maximum(m, cmax)
        s = s * jnp.exp(m - m_new) + sexp * jnp.exp(cmax - m_new)
        return m_new, s, picked + pick

    if n_chunks > 1:
        m, s, picked = lax.fori_loop(1, n_chunks, body, (m, s, picked),
                                     unroll=(n_chunks - 1) <= 8)

    # CrossEntropyLoss per row: nll = (m + lse_rel) - logit_target.
    out_ref[...] = (m + jnp.log(s) - picked).astype(out_ref.dtype)


def _vmem_capacity_bytes():
    try:
        return int(pltpu.get_tpu_info().vmem_capacity_bytes)
    except Exception:
        return 64 * 1024 * 1024  # conservative fallback (v7x per-TensorCore VMEM)


def _pick_chunk(c):
    """Class-chunk width: largest multiple of 128 dividing C, capped at 512
    (bounds the f32 temporaries per sweep); fall back to full C otherwise."""
    if c % _LANE != 0:
        return c
    ck = min(c, 4 * _LANE)
    while c % ck:
        ck -= _LANE
    return ck


def _pick_tiles(h, b, c, pred_itemsize, ck, vmem_limit):
    """(head, batch) tile sizes honouring the real per-step VMEM footprint."""
    # Per (head, batch) row resident in VMEM for one grid step:
    #   predictions tile, double-buffered               : 2 * c * itemsize
    #   targets + NLL-out tiles ((.., bb, 1) blocks are
    #   lane-padded to 128 lanes), double-buffered      : 2 * 2 * 128 * 4
    #   f32 chunk temporaries (upcast / exp / select)   : ~3 * ck * 4
    bytes_per_row = 2 * c * pred_itemsize + 4 * _LANE * 4 + 3 * ck * 4
    budget = (2 * vmem_limit) // 3          # headroom for spills / pipeline state
    max_rows = max(budget // bytes_per_row, _SUBLANE)

    if h * b <= max_rows:                   # whole problem fits one block
        hb, bb = h, b
    elif b <= max_rows:                     # full batch per step, tile the heads
        hb, bb = max(min(max_rows // b, h), 1), b
    else:                                   # tile the batch too (bb multiple of 8)
        hb = 1
        bb = min(max((max_rows // _SUBLANE) * _SUBLANE, _SUBLANE), b)
        # TODO(synk): if even (1, 8, C) exceeds the budget (extreme C), a C grid
        #             axis carrying partial (m, s, picked) stats is needed.

    # Guarantee >=2 grid steps for non-trivial problems so multi-TensorCore chips
    # (v7x) have blocks to share; skip tiny inputs where an extra step is pure waste.
    if (pl.cdiv(h, hb) * pl.cdiv(b, bb) == 1
            and h * b * c * pred_itemsize >= (4 << 20)):
        if h > 1:
            hb = pl.cdiv(h, 2)
        elif b > _SUBLANE:
            bb = max((pl.cdiv(b, 2) // _SUBLANE) * _SUBLANE, _SUBLANE)
    return hb, bb


@jax.jit
def summary_loss(predictions, targets, loss_weights):
    """predictions: [H, B, C] (any float dtype); targets: [H, B] int; loss_weights: [H]."""
    h, b, c = predictions.shape
    tgt3 = targets.reshape(h, b, 1).astype(jnp.int32)

    ck = _pick_chunk(c)
    n_chunks = c // ck
    vmem_limit = (3 * _vmem_capacity_bytes()) // 4
    hb, bb = _pick_tiles(h, b, c, predictions.dtype.itemsize, ck, vmem_limit)

    nll = pl.pallas_call(
        functools.partial(_ce_rows_kernel, ck=ck, n_chunks=n_chunks),
        out_shape=jax.ShapeDtypeStruct((h, b, 1), jnp.float32),
        grid=(pl.cdiv(h, hb), pl.cdiv(b, bb)),
        in_specs=[
            pl.BlockSpec((hb, bb, 1), lambda i, j: (i, j, 0)),   # targets
            pl.BlockSpec((hb, bb, c), lambda i, j: (i, j, 0)),   # logits, native dtype
        ],
        out_specs=pl.BlockSpec((hb, bb, 1), lambda i, j: (i, j, 0)),
        compiler_params=pltpu.CompilerParams(
            # TODO(synk): verify two-TensorCore sharding in the v7x trace; if the
            #             plain "parallel" axes do not split across cores, switch
            #             the head axis to pltpu.CORE_PARALLEL.
            dimension_semantics=("parallel", "parallel"),
            vmem_limit_bytes=vmem_limit,
        ),
    )(tgt3, predictions)

    # Per-head mean + weighted average over H scalars — cheap, done in the wrapper
    # (no resident accumulator, no serial grid axis, no weight DMA per step).
    per_head = jnp.sum(nll[:, :, 0], axis=1) * (1.0 / b)
    w = loss_weights.astype(jnp.float32)
    return jnp.sum(w * per_head) / jnp.sum(w)


def _reference(predictions, targets, loss_weights):
    logp = jax.nn.log_softmax(predictions.astype(jnp.float32), axis=-1)   # (H,B,C)
    nll = -jnp.take_along_axis(logp, targets[..., None].astype(jnp.int32), axis=-1)[..., 0]
    per_head = jnp.mean(nll, axis=-1)                                     # (H,)
    w = loss_weights.astype(jnp.float32)
    return jnp.sum(w * per_head) / jnp.sum(w)


if __name__ == "__main__":
    H, B, C = 3, 8, 128
    key = jax.random.PRNGKey(0)
    k1, k2, k3 = jax.random.split(key, 3)
    # Native bf16 logits — the kernel upcasts per chunk; the wrapper does NOT.
    predictions = jax.random.normal(k1, (H, B, C), dtype=jnp.float32).astype(jnp.bfloat16)
    targets = jax.random.randint(k2, (H, B), 0, C, dtype=jnp.int32)
    loss_weights = jax.random.uniform(k3, (H,), dtype=jnp.float32, minval=0.5, maxval=2.0)

    out = summary_loss(predictions, targets, loss_weights)
    out = jax.block_until_ready(out)

    ref = _reference(predictions, targets, loss_weights)
    assert jnp.allclose(out, ref, rtol=1e-4, atol=1e-5), (out, ref)
    print("KERNEL_OK")
</pallas_src>

<mosaic_0001>
module attributes {stable_mosaic.version = 11 : i64} {
  func.func @_ce_rows_kernel(%arg0: i32, %arg1: i32, %arg2: memref<3x8x1xi32, #tpu.memory_space<vmem>>, %arg3: memref<3x8x128xbf16, #tpu.memory_space<vmem>>, %arg4: memref<3x8x1xf32, #tpu.memory_space<vmem>>) attributes {dimension_semantics = [#tpu.dimension_semantics<parallel>, #tpu.dimension_semantics<parallel>], iteration_bounds = array<i64: 1, 1>, scalar_prefetch = 0 : i64, scratch_operands = 0 : i64, tpu.core_type = #tpu.core_type<tc>, window_params = [{transform_indices = @transform_0, window_bounds = array<i64: 3, 8, 1>}, {transform_indices = @transform_1, window_bounds = array<i64: 3, 8, 128>}, {transform_indices = @transform_2, window_bounds = array<i64: 3, 8, 1>}]} {
    %c0 = arith.constant 0 : index
    %c0_0 = arith.constant 0 : index
    %c0_1 = arith.constant 0 : index
    %0 = vector.load %arg2[%c0, %c0_0, %c0_1] : memref<3x8x1xi32, #tpu.memory_space<vmem>>, vector<3x8x1xi32>
    %c0_2 = arith.constant 0 : index
    %c0_3 = arith.constant 0 : index
    %c0_4 = arith.constant 0 : index
    %1 = vector.load %arg3[%c0_2, %c0_3, %c0_4] : memref<3x8x128xbf16, #tpu.memory_space<vmem>>, vector<3x8x128xbf16>
    %2 = arith.extf %1 : vector<3x8x128xbf16> to vector<3x8x128xf32>
    %cst = arith.constant dense<0xFF800000> : vector<3x8xf32>
    %3 = vector.multi_reduction <maximumf>, %2, %cst [2] : vector<3x8x128xf32> to vector<3x8xf32>
    %4 = vector.shape_cast %3 : vector<3x8xf32> to vector<3x8x1xf32>
    %5 = vector.broadcast %4 : vector<3x8x1xf32> to vector<3x8x128xf32>
    %6 = arith.subf %2, %5 : vector<3x8x128xf32>
    %7 = math.exp %6 : vector<3x8x128xf32>
    %cst_5 = arith.constant dense<0.000000e+00> : vector<3x8xf32>
    %8 = vector.multi_reduction <add>, %7, %cst_5 [2] : vector<3x8x128xf32> to vector<3x8xf32>
    %9 = vector.shape_cast %8 : vector<3x8xf32> to vector<3x8x1xf32>
    %10 = tpu.iota {dimensions = array<i32: 2>} : vector<1x1x128xi32>
    %c0_i32 = arith.constant 0 : i32
    %11 = vector.broadcast %c0_i32 : i32 to vector<1x1x128xi32>
    %12 = arith.addi %10, %11 : vector<1x1x128xi32>
    %13 = vector.broadcast %12 : vector<1x1x128xi32> to vector<3x8x128xi32>
    %14 = vector.broadcast %0 : vector<3x8x1xi32> to vector<3x8x128xi32>
    %15 = arith.cmpi eq, %13, %14 : vector<3x8x128xi32>
    %cst_6 = arith.constant 0.000000e+00 : f32
    %16 = vector.broadcast %cst_6 : f32 to vector<3x8x128xf32>
    %17 = arith.select %15, %2, %16 : vector<3x8x128xi1>, vector<3x8x128xf32>
    %cst_7 = arith.constant dense<0.000000e+00> : vector<3x8xf32>
    %18 = vector.multi_reduction <add>, %17, %cst_7 [2] : vector<3x8x128xf32> to vector<3x8xf32>
    %19 = vector.shape_cast %18 : vector<3x8xf32> to vector<3x8x1xf32>
    %20 = math.log %9 : vector<3x8x1xf32>
    %21 = arith.addf %4, %20 : vector<3x8x1xf32>
    %22 = arith.subf %21, %19 : vector<3x8x1xf32>
    %c0_8 = arith.constant 0 : index
    %c0_9 = arith.constant 0 : index
    %c0_10 = arith.constant 0 : index
    %23 = vector.load %arg4[%c0_8, %c0_9, %c0_10] : memref<3x8x1xf32, #tpu.memory_space<vmem>>, vector<3x8x1xf32>
    tpu.vector_store %arg4[%c0_8, %c0_9, %c0_10], %22 {strides = array<i32>} : memref<3x8x1xf32, #tpu.memory_space<vmem>>, vector<3x8x1xf32>,
    return
  }
  func.func @transform_0(%arg0: i32, %arg1: i32) -> (i32, i32, i32) {
    %c0_i32 = arith.constant 0 : i32
    %c0_i32_0 = arith.constant 0 : i32
    return %arg0, %arg1, %c0_i32 : i32, i32, i32
  }
  func.func @transform_1(%arg0: i32, %arg1: i32) -> (i32, i32, i32) {
    %c0_i32 = arith.constant 0 : i32
    %c0_i32_0 = arith.constant 0 : i32
    return %arg0, %arg1, %c0_i32 : i32, i32, i32
  }
  func.func @transform_2(%arg0: i32, %arg1: i32) -> (i32, i32, i32) {
    %c0_i32 = arith.constant 0 : i32
    %c0_i32_0 = arith.constant 0 : i32
    return %arg0, %arg1, %c0_i32 : i32, i32, i32
  }
}

</mosaic_0001>

<llo_original>
// kernel: summary_loss.1
$region0: #{summary_loss.1}
  #allocation0 [shape = 'u32[]', space=smem, size = 0x4, offset = 0x4, fixed_abs, tag = 'smem constant byte address 0x4 - core index']
  #allocation1 [shape = 'u32[144,128]{1,0:T(1,128)}', space=vmem, size = 0x12000, scoped, tag = 'internal scratch']
  %s0 = inlined_call_operand.vmem [shape: s32[3,8,1], index: 0, kind: input, shape index: {}]
  %s1 = inlined_call_operand.vmem [shape: bf16[3,8,128], index: 1, kind: input, shape index: {}]
  %s2 = inlined_call_operand.vmem [shape: f32[3,8,1], index: 2, kind: output, shape index: {}]
  %s3 = sld [smem:[#allocation0]]
  $region18: #{summary_loss.1} parent=0
    _
  %s5 = ssub.s32 1, %s3
  %s6 = scalar_select 0, %s5, %s3
  // Predicated region
  $region2: #{summary_loss.1} parent=0 // pred_check
    _
  $region3: #{summary_loss.1} parent=0 // pred_check_branch
    %8 = sbr.rel (0) target = $region5
  $region4: #{summary_loss.1} parent=0 // pred_region
    _
  $region5: #{summary_loss.1} parent=0 // pred_fallthru
    _
  // Predicated region
  $region6: #{summary_loss.1} parent=0 // pred_check
    _
  $region7: #{summary_loss.1} parent=0 // pred_check_branch
    %10 = sbr.rel (0) target = $region9
  $region8: #{summary_loss.1} parent=0 // pred_region
    _
  $region9: #{summary_loss.1} parent=0 // pred_fallthru
    _
  %v11 = vld [vmem:[%s0] sm:$0xff]
  %v12 = vld [vmem:[%s0 + $0x8] sm:$0xff]
  %v13 = vld [vmem:[%s0 + $0x10] sm:$0xff]
  %v14 = vld [vmem:[%s1] sm:$0xf]
  %v15 = vld [vmem:[%s1 + $0x4] sm:$0xf]
  %v16 = vld [vmem:[%s1 + $0x8] sm:$0xf]
  %v17 = vunpack.c.l.bf16 %v14
  %v18 = vunpack.c.l.bf16 %v15
  %v19 = vunpack.c.l.bf16 %v16
  %20 = vmax.xlane.f32.xlu0 %v17
  %v21 = vpop.xlane.xlu0 %20
  %22 = vmax.xlane.f32.xlu0 %v18
  %v23 = vpop.xlane.xlu0 %22
  %24 = vmax.xlane.f32.xlu0 %v19
  %v25 = vpop.xlane.xlu0 %24
  %v26 = vsub.f32 %v17, %v21
  %v27 = vsub.f32 %v18, %v23
  %v28 = vsub.f32 %v19, %v25
  %v29 = vmul.f32 %v26, 1.442695
  %v30 = vpow.pop %v29
  %v31 = vmul.f32 %v27, 1.442695
  %v32 = vpow.pop %v31
  %v33 = vmul.f32 %v28, 1.442695
  %v34 = vpow.pop %v33
  %35 = vadd.xlane.f32.xlu0 %v30
  %v36 = vpop.xlane.xlu0 %35
  %37 = vadd.xlane.f32.xlu0 %v32
  %v38 = vpop.xlane.xlu0 %37
  %39 = vadd.xlane.f32.xlu0 %v34
  %v40 = vpop.xlane.xlu0 %39
  %v41 = vlaneseq
  %v42 = vand.u32 %v41, 127
  %43 = vset.pattern.permute.xlu0 0
  %44 = vperm.xlu0 %43, %v11
  %v45 = vpop.permute.xlu0 %44
  %46 = vset.pattern.permute.xlu0 0
  %47 = vperm.xlu0 %46, %v12
  %v48 = vpop.permute.xlu0 %47
  %49 = vset.pattern.permute.xlu0 0
  %50 = vperm.xlu0 %49, %v13
  %v51 = vpop.permute.xlu0 %50
  %vm52 = vcmp.eq.s32.totalorder %v42, %v45
  %vm53 = vcmp.eq.s32.totalorder %v42, %v48
  %vm54 = vcmp.eq.s32.totalorder %v42, %v51
  %v55 = vsel %vm52, %v17, 0.0
  %v56 = vsel %vm53, %v18, 0.0
  %v57 = vsel %vm54, %v19, 0.0
  %58 = vadd.xlane.f32.xlu0 %v55
  %v59 = vpop.xlane.xlu0 %58
  %60 = vadd.xlane.f32.xlu0 %v56
  %v61 = vpop.xlane.xlu0 %60
  %62 = vadd.xlane.f32.xlu0 %v57
  %v63 = vpop.xlane.xlu0 %62
  %v64 = vlog2.pop %v36
  %v65 = vmul.f32 %v64, 0.6931472
  %v66 = vlog2.pop %v38
  %v67 = vmul.f32 %v66, 0.6931472
  %v68 = vlog2.pop %v40
  %v69 = vmul.f32 %v68, 0.6931472
  %v70 = vadd.f32 %v21, %v65
  %v71 = vadd.f32 %v23, %v67
  %v72 = vadd.f32 %v25, %v69
  %v73 = vsub.f32 %v70, %v59
  %v74 = vsub.f32 %v71, %v61
  %v75 = vsub.f32 %v72, %v63
  %vm76 = vcmask 7168
  %77 = vst.msk [vmem:[%s2] sm:$0xff] %vm76, %v73
  %78 = vst.msk [vmem:[%s2 + $0x8] sm:$0xff] %vm76, %v74
  %79 = vst.msk [vmem:[%s2 + $0x10] sm:$0xff] %vm76, %v75
  // Predicated region
  $region10: #{summary_loss.1} parent=0 // pred_check
    _
  $region11: #{summary_loss.1} parent=0 // pred_check_branch
    %81 = sbr.rel (0) target = $region13
  $region12: #{summary_loss.1} parent=0 // pred_region
    _
  $region13: #{summary_loss.1} parent=0 // pred_fallthru
    _
  // Predicated region
  $region14: #{summary_loss.1} parent=0 // pred_check
    _
  $region15: #{summary_loss.1} parent=0 // pred_check_branch
    %83 = sbr.rel (0) target = $region17
  $region16: #{summary_loss.1} parent=0 // pred_region
    _
  $region17: #{summary_loss.1} parent=0 // pred_fallthru
    _

</llo_original>
